<compile_context>
chip_gen: v5e
topology: v5e:2x2
jax: 0.10.0
libtpu: 0.0.40
codegen_flags: <defaults>
</compile_context>

<pallas_src>
import math

import numpy as np

import jax
import jax.numpy as jnp
from jax import lax
from jax.experimental import pallas as pl
from jax.experimental.pallas import tpu as pltpu


# ----------------------------- fused Pallas kernel -----------------------------

def _vmem_spec():
    # Whole-array block resident in VMEM (all shapes here are tiny).
    return pl.BlockSpec(memory_space=pltpu.MemorySpace.VMEM)


def fused_forward_kernel(
    flat_ref,        # (n, n_chans*h*w) f32   flattened patches
    xy_ref,          # (n, 2)           f32   [X, Y]
    w_embed_ref,     # (in_dim, d)      bf16  patch embedding weight
    w_pos_ref,       # (2, d)           f32   coordinate embedding weight
    b_hidden_ref,    # (1, d)           f32   b_embed + b_pos (folded)
    w_qkv_ref,       # (d, 3d)          f32   fused Q|K|V weight
    b_qkv_ref,       # (1, 3d)          f32   fused Q|K|V bias
    wo_ref,          # (d, d)           f32
    bo_ref,          # (1, d)           f32
    w1_ref,          # (d, d_hidden)    f32
    b1_ref,          # (1, d_hidden)    f32
    w2_ref,          # (d_hidden, d)    f32
    b2_ref,          # (1, d)           f32
    w_cls_ref,       # (d, n_classes)   f32
    b_cls_ref,       # (1, n_classes)   f32
    hidden_ref,      # (n, d)           f32   out: last_hidden_state
    pool_ref,        # (1, d)           f32   out: pool_output
    attn_ref,        # (n, n)           f32   out: attentions
    logits_ref,      # (1, n_classes)   f32   out: logits
):
    d = w_pos_ref.shape[1]

    # ---- feat_extractor: linear patch embedding (only deep matmul; bf16 -> MXU) ----
    flat_bf16 = flat_ref[...].astype(jnp.bfloat16)
    feat = jnp.dot(flat_bf16, w_embed_ref[...], preferred_element_type=jnp.float32)

    # ---- (X, Y) coordinate embedding on the VPU (K=2 matmul is MXU-hostile) ----
    xy = xy_ref[...]
    w_pos = w_pos_ref[...]
    pos = xy[:, 0:1] * w_pos[0:1, :] + xy[:, 1:2] * w_pos[1:2, :]

    h0 = feat + pos + b_hidden_ref[...]

    # ---- single-head self-attention block (fused QKV projection) ----
    qkv = (
        jnp.dot(h0, w_qkv_ref[...], preferred_element_type=jnp.float32)
        + b_qkv_ref[...]
    )
    q = qkv[:, 0:d]
    k = qkv[:, d:2 * d]
    v = qkv[:, 2 * d:3 * d]

    scale = 1.0 / math.sqrt(d)
    # contract last axes of q and k directly (no explicit k transpose)
    s = lax.dot_general(
        q, k, (((1,), (1,)), ((), ())), preferred_element_type=jnp.float32
    ) * scale

    m = jnp.max(s, axis=-1, keepdims=True)
    p = jnp.exp(s - m)
    l = jnp.sum(p, axis=-1, keepdims=True)
    a = p * pl.reciprocal(l, approx=True)          # softmax weights
    attn_ref[...] = a.astype(attn_ref.dtype)       # output_attentions=True

    ctx = jnp.dot(a, v, preferred_element_type=jnp.float32)
    h1 = (
        jnp.dot(ctx, wo_ref[...], preferred_element_type=jnp.float32)
        + bo_ref[...]
        + h0                                        # residual
    )

    # ---- MLP block (ReLU, residual) ----
    hmid = jnp.maximum(
        jnp.dot(h1, w1_ref[...], preferred_element_type=jnp.float32) + b1_ref[...],
        0.0,
    )
    h2 = (
        jnp.dot(hmid, w2_ref[...], preferred_element_type=jnp.float32)
        + b2_ref[...]
        + h1                                        # residual
    )
    hidden_ref[...] = h2.astype(hidden_ref.dtype)

    # ---- mean pool + classification head ----
    pool = jnp.mean(h2, axis=0, keepdims=True)
    pool_ref[...] = pool.astype(pool_ref.dtype)
    logits_ref[...] = (
        jnp.dot(pool, w_cls_ref[...], preferred_element_type=jnp.float32)
        + b_cls_ref[...]
    ).astype(logits_ref.dtype)


def pallas_fused_forward(flat, xy, w_embed_bf16, w_pos, b_hidden,
                         w_qkv, b_qkv, wo, bo, w1, b1, w2, b2, w_cls, b_cls):
    n = flat.shape[0]
    d = w_pos.shape[1]
    n_classes = w_cls.shape[1]
    vspec = _vmem_spec()
    return pl.pallas_call(
        fused_forward_kernel,
        out_shape=(
            jax.ShapeDtypeStruct((n, d), jnp.float32),          # last_hidden_state
            jax.ShapeDtypeStruct((1, d), jnp.float32),          # pool_output
            jax.ShapeDtypeStruct((n, n), jnp.float32),          # attentions
            jax.ShapeDtypeStruct((1, n_classes), jnp.float32),  # logits
        ),
        in_specs=[vspec] * 15,
        out_specs=(vspec, vspec, vspec, vspec),
    )(flat, xy, w_embed_bf16, w_pos, b_hidden,
      w_qkv, b_qkv, wo, bo, w1, b1, w2, b2, w_cls, b_cls)


# ----------------------------- params / forward -----------------------------

def init_params(key, n_chans, h, w, d_model, d_hidden, num_classes):
    in_dim = n_chans * h * w
    ks = jax.random.split(key, 12)

    def dense(k, fan_in, fan_out):
        scale = 1.0 / math.sqrt(fan_in)
        return jax.random.uniform(k, (fan_in, fan_out), jnp.float32, -scale, scale)

    return {
        # feat_extractor: linear patch embedding
        "w_embed": dense(ks[0], in_dim, d_model),
        "b_embed": jnp.zeros((d_model,), jnp.float32),
        # seq_model: (X, Y) coordinate embedding
        "w_pos": dense(ks[1], 2, d_model),
        "b_pos": jnp.zeros((d_model,), jnp.float32),
        # seq_model: attention block
        "wq": dense(ks[2], d_model, d_model),
        "wk": dense(ks[3], d_model, d_model),
        "wv": dense(ks[4], d_model, d_model),
        "wo": dense(ks[5], d_model, d_model),
        "bq": jnp.zeros((d_model,), jnp.float32),
        "bk": jnp.zeros((d_model,), jnp.float32),
        "bv": jnp.zeros((d_model,), jnp.float32),
        "bo": jnp.zeros((d_model,), jnp.float32),
        # seq_model: MLP block
        "w1": dense(ks[6], d_model, d_hidden),
        "b1": jnp.zeros((d_hidden,), jnp.float32),
        "w2": dense(ks[7], d_hidden, d_model),
        "b2": jnp.zeros((d_model,), jnp.float32),
        # linear_layer: classification head
        "w_cls": dense(ks[8], d_model, num_classes),
        "b_cls": jnp.zeros((num_classes,), jnp.float32),
    }


@jax.jit
def exact_seq_classifier_forward(params, patches, X, Y):
    """Mirrors ExactSeqClassifier.forward(patches, X, Y)."""
    n_patches, n_chans, h, w = patches.shape

    # features = self.feat_extractor(patches): flatten NCHW row-major, embed
    flat = patches.reshape(n_patches, n_chans * h * w)
    xy = jnp.stack([X, Y], axis=-1).astype(jnp.float32)          # (n_patches, 2)

    # fold / fuse params for the single kernel (constant-folded under jit)
    w_embed_bf16 = params["w_embed"].astype(jnp.bfloat16)
    b_hidden = (params["b_embed"] + params["b_pos"]).reshape(1, -1)
    w_qkv = jnp.concatenate([params["wq"], params["wk"], params["wv"]], axis=1)
    b_qkv = jnp.concatenate(
        [params["bq"], params["bk"], params["bv"]]).reshape(1, -1)

    hidden, pool, attn, logits = pallas_fused_forward(
        flat, xy, w_embed_bf16, params["w_pos"], b_hidden,
        w_qkv, b_qkv,
        params["wo"], params["bo"].reshape(1, -1),
        params["w1"], params["b1"].reshape(1, -1),
        params["w2"], params["b2"].reshape(1, -1),
        params["w_cls"], params["b_cls"].reshape(1, -1),
    )

    return {
        "last_hidden_state": hidden,   # (n_patches, d_model)
        "pool_output": pool[0],        # (d_model,)
        "attentions": attn,            # (n_patches, n_patches)
        # out['logits'] = self.linear_layer(out['pool_output'])
        "logits": logits[0],           # (num_classes,)
    }


# ----------------------------- pure-JAX reference -----------------------------

def reference_forward(params, patches, X, Y):
    n_patches = patches.shape[0]
    flat = patches.reshape(n_patches, -1)
    feat = flat @ params["w_embed"] + params["b_embed"]
    pos = jnp.stack([X, Y], axis=-1) @ params["w_pos"] + params["b_pos"]
    h0 = feat + pos
    q = h0 @ params["wq"] + params["bq"]
    k = h0 @ params["wk"] + params["bk"]
    v = h0 @ params["wv"] + params["bv"]
    s = (q @ k.T) / math.sqrt(h0.shape[-1])
    a = jax.nn.softmax(s, axis=-1)
    h1 = (a @ v) @ params["wo"] + params["bo"] + h0
    hmid = jax.nn.relu(h1 @ params["w1"] + params["b1"])
    h2 = hmid @ params["w2"] + params["b2"] + h1
    pool = h2.mean(axis=0)
    logits = pool @ params["w_cls"] + params["b_cls"]
    return {"last_hidden_state": h2, "pool_output": pool,
            "attentions": a, "logits": logits}


# ----------------------------- main -----------------------------

if __name__ == "__main__":
    N_PATCHES, N_CHANS, H, W = 8, 4, 16, 16
    D_MODEL, D_HIDDEN, NUM_CLASSES = 32, 64, 10

    key = jax.random.PRNGKey(0)
    k_patches, k_x, k_y, k_params = jax.random.split(key, 4)

    patches = jax.random.normal(k_patches, (N_PATCHES, N_CHANS, H, W), jnp.float32)
    X = jax.random.uniform(k_x, (N_PATCHES,), jnp.float32)
    Y = jax.random.uniform(k_y, (N_PATCHES,), jnp.float32)

    params = init_params(k_params, N_CHANS, H, W, D_MODEL, D_HIDDEN, NUM_CLASSES)

    out = exact_seq_classifier_forward(params, patches, X, Y)
    jax.block_until_ready(out)

    assert out["last_hidden_state"].shape == (N_PATCHES, D_MODEL)
    assert out["pool_output"].shape == (D_MODEL,)
    assert out["attentions"].shape == (N_PATCHES, N_PATCHES)
    assert out["logits"].shape == (NUM_CLASSES,)

    # Correctness vs. f32 reference (bf16 embedding matmul + approx reciprocal
    # introduce small, bounded error).
    ref = reference_forward(params, patches, X, Y)
    for name in ("last_hidden_state", "pool_output", "attentions", "logits"):
        np.testing.assert_allclose(
            np.asarray(out[name]), np.asarray(ref[name]), rtol=5e-2, atol=5e-2,
            err_msg=f"mismatch in {name}")

    print("KERNEL_OK")
</pallas_src>

<mosaic_0001>
module attributes {stable_mosaic.version = 11 : i64} {
  func.func @fused_forward_kernel(%arg0: memref<8x1024xf32, #tpu.memory_space<vmem>>, %arg1: memref<8x2xf32, #tpu.memory_space<vmem>>, %arg2: memref<1024x32xbf16, #tpu.memory_space<vmem>>, %arg3: memref<2x32xf32, #tpu.memory_space<vmem>>, %arg4: memref<1x32xf32, #tpu.memory_space<vmem>>, %arg5: memref<32x96xf32, #tpu.memory_space<vmem>>, %arg6: memref<1x96xf32, #tpu.memory_space<vmem>>, %arg7: memref<32x32xf32, #tpu.memory_space<vmem>>, %arg8: memref<1x32xf32, #tpu.memory_space<vmem>>, %arg9: memref<32x64xf32, #tpu.memory_space<vmem>>, %arg10: memref<1x64xf32, #tpu.memory_space<vmem>>, %arg11: memref<64x32xf32, #tpu.memory_space<vmem>>, %arg12: memref<1x32xf32, #tpu.memory_space<vmem>>, %arg13: memref<32x10xf32, #tpu.memory_space<vmem>>, %arg14: memref<1x10xf32, #tpu.memory_space<vmem>>, %arg15: memref<8x32xf32, #tpu.memory_space<vmem>>, %arg16: memref<1x32xf32, #tpu.memory_space<vmem>>, %arg17: memref<8x8xf32, #tpu.memory_space<vmem>>, %arg18: memref<1x10xf32, #tpu.memory_space<vmem>>) attributes {dimension_semantics = [], scalar_prefetch = 0 : i64, scratch_operands = 0 : i64, tpu.core_type = #tpu.core_type<tc>} {
    %c0 = arith.constant 0 : index
    %c0_0 = arith.constant 0 : index
    %0 = vector.load %arg0[%c0, %c0_0] : memref<8x1024xf32, #tpu.memory_space<vmem>>, vector<8x1024xf32>
    %1 = arith.truncf %0 : vector<8x1024xf32> to vector<8x1024xbf16>
    %c0_1 = arith.constant 0 : index
    %c0_2 = arith.constant 0 : index
    %2 = vector.load %arg2[%c0_1, %c0_2] : memref<1024x32xbf16, #tpu.memory_space<vmem>>, vector<1024x32xbf16>
    %cst = arith.constant dense<0.000000e+00> : vector<8x32xf32>
    %3 = tpu.matmul %1, %2, %cst {dimension_numbers = #tpu.dot_dimension_numbers<[1], [0], [0], [1], [0, 0, 1, 1], [], []>} : vector<8x1024xbf16>, vector<1024x32xbf16>, vector<8x32xf32> -> vector<8x32xf32>
    %c0_3 = arith.constant 0 : index
    %c0_4 = arith.constant 0 : index
    %4 = vector.load %arg1[%c0_3, %c0_4] : memref<8x2xf32, #tpu.memory_space<vmem>>, vector<8x2xf32>
    %c0_5 = arith.constant 0 : index
    %c0_6 = arith.constant 0 : index
    %5 = vector.load %arg3[%c0_5, %c0_6] : memref<2x32xf32, #tpu.memory_space<vmem>>, vector<2x32xf32>
    %6 = vector.extract_strided_slice %4 {offsets = [0, 0], sizes = [8, 1], strides = [1, 1]} : vector<8x2xf32> to vector<8x1xf32>
    %7 = vector.extract_strided_slice %5 {offsets = [0, 0], sizes = [1, 32], strides = [1, 1]} : vector<2x32xf32> to vector<1x32xf32>
    %8 = vector.broadcast %6 : vector<8x1xf32> to vector<8x32xf32>
    %9 = vector.broadcast %7 : vector<1x32xf32> to vector<8x32xf32>
    %10 = arith.mulf %8, %9 : vector<8x32xf32>
    %11 = vector.extract_strided_slice %4 {offsets = [0, 1], sizes = [8, 1], strides = [1, 1]} : vector<8x2xf32> to vector<8x1xf32>
    %12 = vector.extract_strided_slice %5 {offsets = [1, 0], sizes = [1, 32], strides = [1, 1]} : vector<2x32xf32> to vector<1x32xf32>
    %13 = vector.broadcast %11 : vector<8x1xf32> to vector<8x32xf32>
    %14 = vector.broadcast %12 : vector<1x32xf32> to vector<8x32xf32>
    %15 = arith.mulf %13, %14 : vector<8x32xf32>
    %16 = arith.addf %10, %15 : vector<8x32xf32>
    %17 = arith.addf %3, %16 : vector<8x32xf32>
    %c0_7 = arith.constant 0 : index
    %c0_8 = arith.constant 0 : index
    %18 = vector.load %arg4[%c0_7, %c0_8] : memref<1x32xf32, #tpu.memory_space<vmem>>, vector<1x32xf32>
    %19 = vector.broadcast %18 : vector<1x32xf32> to vector<8x32xf32>
    %20 = arith.addf %17, %19 : vector<8x32xf32>
    %c0_9 = arith.constant 0 : index
    %c0_10 = arith.constant 0 : index
    %21 = vector.load %arg5[%c0_9, %c0_10] : memref<32x96xf32, #tpu.memory_space<vmem>>, vector<32x96xf32>
    %cst_11 = arith.constant dense<0.000000e+00> : vector<8x96xf32>
    %22 = tpu.matmul %20, %21, %cst_11 {dimension_numbers = #tpu.dot_dimension_numbers<[1], [0], [0], [1], [0, 0, 1, 1], [], []>} : vector<8x32xf32>, vector<32x96xf32>, vector<8x96xf32> -> vector<8x96xf32>
    %c0_12 = arith.constant 0 : index
    %c0_13 = arith.constant 0 : index
    %23 = vector.load %arg6[%c0_12, %c0_13] : memref<1x96xf32, #tpu.memory_space<vmem>>, vector<1x96xf32>
    %24 = vector.broadcast %23 : vector<1x96xf32> to vector<8x96xf32>
    %25 = arith.addf %22, %24 : vector<8x96xf32>
    %26 = vector.extract_strided_slice %25 {offsets = [0, 0], sizes = [8, 32], strides = [1, 1]} : vector<8x96xf32> to vector<8x32xf32>
    %27 = vector.extract_strided_slice %25 {offsets = [0, 32], sizes = [8, 32], strides = [1, 1]} : vector<8x96xf32> to vector<8x32xf32>
    %28 = vector.extract_strided_slice %25 {offsets = [0, 64], sizes = [8, 32], strides = [1, 1]} : vector<8x96xf32> to vector<8x32xf32>
    %cst_14 = arith.constant dense<0.000000e+00> : vector<8x8xf32>
    %29 = tpu.matmul %26, %27, %cst_14 {dimension_numbers = #tpu.dot_dimension_numbers<[1], [1], [0], [0], [0, 0, 1, 0], [], []>} : vector<8x32xf32>, vector<8x32xf32>, vector<8x8xf32> -> vector<8x8xf32>
    %cst_15 = arith.constant 0.176776692 : f32
    %30 = vector.broadcast %cst_15 : f32 to vector<8x8xf32>
    %31 = arith.mulf %29, %30 : vector<8x8xf32>
    %cst_16 = arith.constant dense<0xFF800000> : vector<8xf32>
    %32 = vector.multi_reduction <maximumf>, %31, %cst_16 [1] : vector<8x8xf32> to vector<8xf32>
    %33 = vector.shape_cast %32 : vector<8xf32> to vector<8x1xf32>
    %34 = vector.broadcast %33 : vector<8x1xf32> to vector<8x8xf32>
    %35 = arith.subf %31, %34 : vector<8x8xf32>
    %36 = math.exp %35 : vector<8x8xf32>
    %cst_17 = arith.constant dense<0.000000e+00> : vector<8xf32>
    %37 = vector.multi_reduction <add>, %36, %cst_17 [1] : vector<8x8xf32> to vector<8xf32>
    %38 = vector.shape_cast %37 : vector<8xf32> to vector<8x1xf32>
    %39 = tpu.reciprocal %38 {approx = true} : vector<8x1xf32> -> vector<8x1xf32>
    %40 = vector.broadcast %39 : vector<8x1xf32> to vector<8x8xf32>
    %41 = arith.mulf %36, %40 : vector<8x8xf32>
    %c0_18 = arith.constant 0 : index
    %c0_19 = arith.constant 0 : index
    %42 = vector.load %arg17[%c0_18, %c0_19] : memref<8x8xf32, #tpu.memory_space<vmem>>, vector<8x8xf32>
    tpu.vector_store %arg17[%c0_18, %c0_19], %41 {strides = array<i32>} : memref<8x8xf32, #tpu.memory_space<vmem>>, vector<8x8xf32>,
    %cst_20 = arith.constant dense<0.000000e+00> : vector<8x32xf32>
    %43 = tpu.matmul %41, %28, %cst_20 {dimension_numbers = #tpu.dot_dimension_numbers<[1], [0], [0], [1], [0, 0, 1, 1], [], []>} : vector<8x8xf32>, vector<8x32xf32>, vector<8x32xf32> -> vector<8x32xf32>
    %c0_21 = arith.constant 0 : index
    %c0_22 = arith.constant 0 : index
    %44 = vector.load %arg7[%c0_21, %c0_22] : memref<32x32xf32, #tpu.memory_space<vmem>>, vector<32x32xf32>
    %cst_23 = arith.constant dense<0.000000e+00> : vector<8x32xf32>
    %45 = tpu.matmul %43, %44, %cst_23 {dimension_numbers = #tpu.dot_dimension_numbers<[1], [0], [0], [1], [0, 0, 1, 1], [], []>} : vector<8x32xf32>, vector<32x32xf32>, vector<8x32xf32> -> vector<8x32xf32>
    %c0_24 = arith.constant 0 : index
    %c0_25 = arith.constant 0 : index
    %46 = vector.load %arg8[%c0_24, %c0_25] : memref<1x32xf32, #tpu.memory_space<vmem>>, vector<1x32xf32>
    %47 = vector.broadcast %46 : vector<1x32xf32> to vector<8x32xf32>
    %48 = arith.addf %45, %47 : vector<8x32xf32>
    %49 = arith.addf %48, %20 : vector<8x32xf32>
    %c0_26 = arith.constant 0 : index
    %c0_27 = arith.constant 0 : index
    %50 = vector.load %arg9[%c0_26, %c0_27] : memref<32x64xf32, #tpu.memory_space<vmem>>, vector<32x64xf32>
    %cst_28 = arith.constant dense<0.000000e+00> : vector<8x64xf32>
    %51 = tpu.matmul %49, %50, %cst_28 {dimension_numbers = #tpu.dot_dimension_numbers<[1], [0], [0], [1], [0, 0, 1, 1], [], []>} : vector<8x32xf32>, vector<32x64xf32>, vector<8x64xf32> -> vector<8x64xf32>
    %c0_29 = arith.constant 0 : index
    %c0_30 = arith.constant 0 : index
    %52 = vector.load %arg10[%c0_29, %c0_30] : memref<1x64xf32, #tpu.memory_space<vmem>>, vector<1x64xf32>
    %53 = vector.broadcast %52 : vector<1x64xf32> to vector<8x64xf32>
    %54 = arith.addf %51, %53 : vector<8x64xf32>
    %cst_31 = arith.constant 0.000000e+00 : f32
    %55 = vector.broadcast %cst_31 : f32 to vector<8x64xf32>
    %56 = arith.maximumf %54, %55 : vector<8x64xf32>
    %c0_32 = arith.constant 0 : index
    %c0_33 = arith.constant 0 : index
    %57 = vector.load %arg11[%c0_32, %c0_33] : memref<64x32xf32, #tpu.memory_space<vmem>>, vector<64x32xf32>
    %cst_34 = arith.constant dense<0.000000e+00> : vector<8x32xf32>
    %58 = tpu.matmul %56, %57, %cst_34 {dimension_numbers = #tpu.dot_dimension_numbers<[1], [0], [0], [1], [0, 0, 1, 1], [], []>} : vector<8x64xf32>, vector<64x32xf32>, vector<8x32xf32> -> vector<8x32xf32>
    %c0_35 = arith.constant 0 : index
    %c0_36 = arith.constant 0 : index
    %59 = vector.load %arg12[%c0_35, %c0_36] : memref<1x32xf32, #tpu.memory_space<vmem>>, vector<1x32xf32>
    %60 = vector.broadcast %59 : vector<1x32xf32> to vector<8x32xf32>
    %61 = arith.addf %58, %60 : vector<8x32xf32>
    %62 = arith.addf %61, %49 : vector<8x32xf32>
    %c0_37 = arith.constant 0 : index
    %c0_38 = arith.constant 0 : index
    %63 = vector.load %arg15[%c0_37, %c0_38] : memref<8x32xf32, #tpu.memory_space<vmem>>, vector<8x32xf32>
    tpu.vector_store %arg15[%c0_37, %c0_38], %62 {strides = array<i32>} : memref<8x32xf32, #tpu.memory_space<vmem>>, vector<8x32xf32>,
    %cst_39 = arith.constant dense<0.000000e+00> : vector<32xf32>
    %64 = vector.multi_reduction <add>, %62, %cst_39 [0] : vector<8x32xf32> to vector<32xf32>
    %65 = vector.shape_cast %64 : vector<32xf32> to vector<1x32xf32>
    %cst_40 = arith.constant 8.000000e+00 : f32
    %66 = vector.broadcast %cst_40 : f32 to vector<1x32xf32>
    %67 = arith.divf %65, %66 : vector<1x32xf32>
    %c0_41 = arith.constant 0 : index
    %c0_42 = arith.constant 0 : index
    %68 = vector.load %arg16[%c0_41, %c0_42] : memref<1x32xf32, #tpu.memory_space<vmem>>, vector<1x32xf32>
    tpu.vector_store %arg16[%c0_41, %c0_42], %67 {strides = array<i32>} : memref<1x32xf32, #tpu.memory_space<vmem>>, vector<1x32xf32>,
    %c0_43 = arith.constant 0 : index
    %c0_44 = arith.constant 0 : index
    %69 = vector.load %arg13[%c0_43, %c0_44] : memref<32x10xf32, #tpu.memory_space<vmem>>, vector<32x10xf32>
    %cst_45 = arith.constant dense<0.000000e+00> : vector<1x10xf32>
    %70 = tpu.matmul %67, %69, %cst_45 {dimension_numbers = #tpu.dot_dimension_numbers<[1], [0], [0], [1], [0, 0, 1, 1], [], []>} : vector<1x32xf32>, vector<32x10xf32>, vector<1x10xf32> -> vector<1x10xf32>
    %c0_46 = arith.constant 0 : index
    %c0_47 = arith.constant 0 : index
    %71 = vector.load %arg14[%c0_46, %c0_47] : memref<1x10xf32, #tpu.memory_space<vmem>>, vector<1x10xf32>
    %72 = arith.addf %70, %71 : vector<1x10xf32>
    %c0_48 = arith.constant 0 : index
    %c0_49 = arith.constant 0 : index
    %73 = vector.load %arg18[%c0_48, %c0_49] : memref<1x10xf32, #tpu.memory_space<vmem>>, vector<1x10xf32>
    tpu.vector_store %arg18[%c0_48, %c0_49], %72 {strides = array<i32>} : memref<1x10xf32, #tpu.memory_space<vmem>>, vector<1x10xf32>,
    return
  }
}

</mosaic_0001>

<llo_original>
// kernel: exact_seq_classifier_forward.1
$region0: #{exact_seq_classifier_forward.1}
  #allocation0 [shape = 'u32[]', space=smem, size = 0x4, offset = 0x4, fixed_abs, tag = 'smem constant byte address 0x4 - core index']
  #allocation1 [shape = 'u32[72,128]{1,0:T(1,128)}', space=vmem, size = 0x9000, scoped, tag = 'internal scratch']
  %s0 = inlined_call_operand.vmem [shape: f32[8,1024], index: 0, kind: input, shape index: {}]
  %s1 = inlined_call_operand.vmem [shape: f32[8,2], index: 1, kind: input, shape index: {}]
  %s2 = inlined_call_operand.vmem [shape: bf16[1024,32], index: 2, kind: input, shape index: {}]
  %s3 = inlined_call_operand.vmem [shape: f32[2,32], index: 3, kind: input, shape index: {}]
  %s4 = inlined_call_operand.vmem [shape: f32[1,32], index: 4, kind: input, shape index: {}]
  %s5 = inlined_call_operand.vmem [shape: f32[32,96], index: 5, kind: input, shape index: {}]
  %s6 = inlined_call_operand.vmem [shape: f32[1,96], index: 6, kind: input, shape index: {}]
  %s7 = inlined_call_operand.vmem [shape: f32[32,32], index: 7, kind: input, shape index: {}]
  %s8 = inlined_call_operand.vmem [shape: f32[1,32], index: 8, kind: input, shape index: {}]
  %s9 = inlined_call_operand.vmem [shape: f32[32,64], index: 9, kind: input, shape index: {}]
  %s10 = inlined_call_operand.vmem [shape: f32[1,64], index: 10, kind: input, shape index: {}]
  %s11 = inlined_call_operand.vmem [shape: f32[64,32], index: 11, kind: input, shape index: {}]
  %s12 = inlined_call_operand.vmem [shape: f32[1,32], index: 12, kind: input, shape index: {}]
  %s13 = inlined_call_operand.vmem [shape: f32[32,10], index: 13, kind: input, shape index: {}]
  %s14 = inlined_call_operand.vmem [shape: f32[1,10], index: 14, kind: input, shape index: {}]
  %s15 = inlined_call_operand.hbm [shape: f32[8,32], index: 15, kind: output, shape index: {0}]
  %s16 = inlined_call_operand.hbm [shape: f32[1,32], index: 16, kind: output, shape index: {1}]
  %s17 = inlined_call_operand.hbm [shape: f32[8,8], index: 17, kind: output, shape index: {2}]
  %s18 = inlined_call_operand.hbm [shape: f32[1,10], index: 18, kind: output, shape index: {3}]
  %19 = xla_tuple %s15, %s16, %s17, %s18
  %s20 = sld [smem:[#allocation0]]
  $region94: #{exact_seq_classifier_forward.1} parent=0
    _
  %s22 = ssub.s32 1, %s20
  %s23 = scalar_select 0, %s22, %s20
  $region1: #{exact_seq_classifier_forward.1} parent=0
    #allocation2 [shape = 'u8[4096]{0}', space=vmem, size = 0x1000, scoped, tag = 'output window, operand 0, single buffered']
    #allocation3 [shape = 's32[1]{0}', space=sflag, size = 0x4, scoped, tag = 'scoped memory for exact_seq_classifier_forward.1']
    #allocation4 [shape = 'u8[512]{0}', space=vmem, size = 0x400, scoped, tag = 'output window, operand 1, single buffered']
    #allocation5 [shape = 's32[1]{0}', space=sflag, size = 0x4, scoped, tag = 'scoped memory for exact_seq_classifier_forward.1']
    #allocation6 [shape = 'u8[4096]{0}', space=vmem, size = 0x1000, scoped, tag = 'output window, operand 2, single buffered']
    #allocation7 [shape = 'u8[512]{0}', space=vmem, size = 0x400, scoped, tag = 'output window, operand 3, single buffered']
    #allocation8 [shape = 's32[1]{0}', space=sflag, size = 0x4, scoped, tag = 'scoped memory for exact_seq_classifier_forward.1']
    %24 = vsyncpa [#allocation3], 0
    %25 = vsyncpa [#allocation5], 0
    %26 = vsyncpa [#allocation8], 0
    // Predicated region
    $region2: #{exact_seq_classifier_forward.1} parent=1 // pred_check
      _
    $region3: #{exact_seq_classifier_forward.1} parent=1 // pred_check_branch
      %28 = sbr.rel (0) target = $region5
    $region4: #{exact_seq_classifier_forward.1} parent=1 // pred_region
      _
    $region5: #{exact_seq_classifier_forward.1} parent=1 // pred_fallthru
      _
    // Predicated region
    $region6: #{exact_seq_classifier_forward.1} parent=1 // pred_check
      _
    $region7: #{exact_seq_classifier_forward.1} parent=1 // pred_check_branch
      %30 = sbr.rel (0) target = $region9
    $region8: #{exact_seq_classifier_forward.1} parent=1 // pred_region
      _
    $region9: #{exact_seq_classifier_forward.1} parent=1 // pred_fallthru
      _
    // Predicated region
    $region10: #{exact_seq_classifier_forward.1} parent=1 // pred_check
      _
    $region11: #{exact_seq_classifier_forward.1} parent=1 // pred_check_branch
      %32 = sbr.rel (0) target = $region13
    $region12: #{exact_seq_classifier_forward.1} parent=1 // pred_region
      _
    $region13: #{exact_seq_classifier_forward.1} parent=1 // pred_fallthru
      _
    // Predicated region
    $region14: #{exact_seq_classifier_forward.1} parent=1 // pred_check
      _
    $region15: #{exact_seq_classifier_forward.1} parent=1 // pred_check_branch
      %34 = sbr.rel (0) target = $region17
    $region16: #{exact_seq_classifier_forward.1} parent=1 // pred_region
      _
    $region17: #{exact_seq_classifier_forward.1} parent=1 // pred_fallthru
      _
    // Predicated region
    $region18: #{exact_seq_classifier_forward.1} parent=1 // pred_check
      _
    $region19: #{exact_seq_classifier_forward.1} parent=1 // pred_check_branch
      %36 = sbr.rel (0) target = $region21
    $region20: #{exact_seq_classifier_forward.1} parent=1 // pred_region
      _
    $region21: #{exact_seq_classifier_forward.1} parent=1 // pred_fallthru
      _
    // Predicated region
    $region22: #{exact_seq_classifier_forward.1} parent=1 // pred_check
      _
    $region23: #{exact_seq_classifier_forward.1} parent=1 // pred_check_branch
      %38 = sbr.rel (0) target = $region25
    $region24: #{exact_seq_classifier_forward.1} parent=1 // pred_region
      _
    $region25: #{exact_seq_classifier_forward.1} parent=1 // pred_fallthru
      _
    // Predicated region
    $region26: #{exact_seq_classifier_forward.1} parent=1 // pred_check
      _
    $region27: #{exact_seq_classifier_forward.1} parent=1 // pred_check_branch
      %40 = sbr.rel (0) target = $region29
    $region28: #{exact_seq_classifier_forward.1} parent=1 // pred_region
      _
    $region29: #{exact_seq_classifier_forward.1} parent=1 // pred_fallthru
      _
    // Predicated region
    $region30: #{exact_seq_classifier_forward.1} parent=1 // pred_check
      _
    $region31: #{exact_seq_classifier_forward.1} parent=1 // pred_check_branch
      %42 = sbr.rel (0) target = $region33
    $region32: #{exact_seq_classifier_forward.1} parent=1 // pred_region
      _
    $region33: #{exact_seq_classifier_forward.1} parent=1 // pred_fallthru
      _
    // Predicated region
    $region34: #{exact_seq_classifier_forward.1} parent=1 // pred_check
      _
    $region35: #{exact_seq_classifier_forward.1} parent=1 // pred_check_branch
      %44 = sbr.rel (0) target = $region37
    $region36: #{exact_seq_classifier_forward.1} parent=1 // pred_region
      _
    $region37: #{exact_seq_classifier_forward.1} parent=1 // pred_fallthru
      _
    // Predicated region
    $region38: #{exact_seq_classifier_forward.1} parent=1 // pred_check
      _
    $region39: #{exact_seq_classifier_forward.1} parent=1 // pred_check_branch
      %46 = sbr.rel (0) target = $region41
    $region40: #{exact_seq_classifier_forward.1} parent=1 // pred_region
      _
    $region41: #{exact_seq_classifier_forward.1} parent=1 // pred_fallthru
      _
    // Predicated region
    $region42: #{exact_seq_classifier_forward.1} parent=1 // pred_check
      _
    $region43: #{exact_seq_classifier_forward.1} parent=1 // pred_check_branch
      %48 = sbr.rel (0) target = $region45
    $region44: #{exact_seq_classifier_forward.1} parent=1 // pred_region
      _
    $region45: #{exact_seq_classifier_forward.1} parent=1 // pred_fallthru
      _
    // Predicated region
    $region46: #{exact_seq_classifier_forward.1} parent=1 // pred_check
      _
    $region47: #{exact_seq_classifier_forward.1} parent=1 // pred_check_branch
      %50 = sbr.rel (0) target = $region49
    $region48: #{exact_seq_classifier_forward.1} parent=1 // pred_region
      _
    $region49: #{exact_seq_classifier_forward.1} parent=1 // pred_fallthru
      _
    // Predicated region
    $region50: #{exact_seq_classifier_forward.1} parent=1 // pred_check
      _
    $region51: #{exact_seq_classifier_forward.1} parent=1 // pred_check_branch
      %52 = sbr.rel (0) target = $region53
    $region52: #{exact_seq_classifier_forward.1} parent=1 // pred_region
      _
    $region53: #{exact_seq_classifier_forward.1} parent=1 // pred_fallthru
      _
    // Predicated region
    $region54: #{exact_seq_classifier_forward.1} parent=1 // pred_check
      _
    $region55: #{exact_seq_classifier_forward.1} parent=1 // pred_check_branch
      %54 = sbr.rel (0) target = $region57
    $region56: #{exact_seq_classifier_forward.1} parent=1 // pred_region
      _
    $region57: #{exact_seq_classifier_forward.1} parent=1 // pred_fallthru
      _
    // Predicated region
    $region58: #{exact_seq_classifier_forward.1} parent=1 // pred_check
      _
    $region59: #{exact_seq_classifier_forward.1} parent=1 // pred_check_branch
      %56 = sbr.rel (0) target = $region61
    $region60: #{exact_seq_classifier_forward.1} parent=1 // pred_region
      _
    $region61: #{exact_seq_classifier_forward.1} parent=1 // pred_fallthru
      _
    %v57 = vld [vmem:[%s0] sm:$0xff]
    %v58 = vld [vmem:[%s0 + $0x8] sm:$0xff]
    %v59 = vld [vmem:[%s0 + $0x10] sm:$0xff]
    %v60 = vld [vmem:[%s0 + $0x18] sm:$0xff]
    %v61 = vld [vmem:[%s0 + $0x20] sm:$0xff]
    %v62 = vld [vmem:[%s0 + $0x28] sm:$0xff]
    %v63 = vld [vmem:[%s0 + $0x30] sm:$0xff]
    %v64 = vld [vmem:[%s0 + $0x38] sm:$0xff]
    %v65 = vpack.c.bf16 %v57, %v57
    %v66 = vpack.c.bf16 %v58, %v58
    %v67 = vpack.c.bf16 %v59, %v59
    %v68 = vpack.c.bf16 %v60, %v60
    %v69 = vpack.c.bf16 %v61, %v61
    %v70 = vpack.c.bf16 %v62, %v62
    %v71 = vpack.c.bf16 %v63, %v63
    %v72 = vpack.c.bf16 %v64, %v64
    %v73 = vld [vmem:[%s2] sm:$0xf]
    %v74 = vld [vmem:[%s2 + $0x4] sm:$0xf]
    %v75 = vld [vmem:[%s2 + $0x8] sm:$0xf]
    %v76 = vld [vmem:[%s2 + $0xc] sm:$0xf]
    %v77 = vld [vmem:[%s2 + $0x10] sm:$0xf]
    %v78 = vld [vmem:[%s2 + $0x14] sm:$0xf]
    %v79 = vld [vmem:[%s2 + $0x18] sm:$0xf]
    %v80 = vld [vmem:[%s2 + $0x1c] sm:$0xf]
    %v81 = vld [vmem:[%s2 + $0x20] sm:$0xf]
    %v82 = vld [vmem:[%s2 + $0x24] sm:$0xf]
    %v83 = vld [vmem:[%s2 + $0x28] sm:$0xf]
    %v84 = vld [vmem:[%s2 + $0x2c] sm:$0xf]
    %v85 = vld [vmem:[%s2 + $0x30] sm:$0xf]
    %v86 = vld [vmem:[%s2 + $0x34] sm:$0xf]
    %v87 = vld [vmem:[%s2 + $0x38] sm:$0xf]
    %v88 = vld [vmem:[%s2 + $0x3c] sm:$0xf]
    %v89 = vld [vmem:[%s2 + $0x40] sm:$0xf]
    %v90 = vld [vmem:[%s2 + $0x44] sm:$0xf]
    %v91 = vld [vmem:[%s2 + $0x48] sm:$0xf]
    %v92 = vld [vmem:[%s2 + $0x4c] sm:$0xf]
    %v93 = vld [vmem:[%s2 + $0x50] sm:$0xf]
    %v94 = vld [vmem:[%s2 + $0x54] sm:$0xf]
    %v95 = vld [vmem:[%s2 + $0x58] sm:$0xf]
    %v96 = vld [vmem:[%s2 + $0x5c] sm:$0xf]
    %v97 = vld [vmem:[%s2 + $0x60] sm:$0xf]
    %v98 = vld [vmem:[%s2 + $0x64] sm:$0xf]
    %v99 = vld [vmem:[%s2 + $0x68] sm:$0xf]
    %v100 = vld [vmem:[%s2 + $0x6c] sm:$0xf]
    %v101 = vld [vmem:[%s2 + $0x70] sm:$0xf]
    %v102 = vld [vmem:[%s2 + $0x74] sm:$0xf]
    %v103 = vld [vmem:[%s2 + $0x78] sm:$0xf]
    %v104 = vld [vmem:[%s2 + $0x7c] sm:$0xf]
    %v105 = vld [vmem:[%s2 + $0x80] sm:$0xf]
    %v106 = vld [vmem:[%s2 + $0x84] sm:$0xf]
    %v107 = vld [vmem:[%s2 + $0x88] sm:$0xf]
    %v108 = vld [vmem:[%s2 + $0x8c] sm:$0xf]
    %v109 = vld [vmem:[%s2 + $0x90] sm:$0xf]
    %v110 = vld [vmem:[%s2 + $0x94] sm:$0xf]
    %v111 = vld [vmem:[%s2 + $0x98] sm:$0xf]
    %v112 = vld [vmem:[%s2 + $0x9c] sm:$0xf]
    %v113 = vld [vmem:[%s2 + $0xa0] sm:$0xf]
    %v114 = vld [vmem:[%s2 + $0xa4] sm:$0xf]
    %v115 = vld [vmem:[%s2 + $0xa8] sm:$0xf]
    %v116 = vld [vmem:[%s2 + $0xac] sm:$0xf]
    %v117 = vld [vmem:[%s2 + $0xb0] sm:$0xf]
    %v118 = vld [vmem:[%s2 + $0xb4] sm:$0xf]
    %v119 = vld [vmem:[%s2 + $0xb8] sm:$0xf]
    %v120 = vld [vmem:[%s2 + $0xbc] sm:$0xf]
    %v121 = vld [vmem:[%s2 + $0xc0] sm:$0xf]
    %v122 = vld [vmem:[%s2 + $0xc4] sm:$0xf]
    %v123 = vld [vmem:[%s2 + $0xc8] sm:$0xf]
    %v124 = vld [vmem:[%s2 + $0xcc] sm:$0xf]
    %v125 = vld [vmem:[%s2 + $0xd0] sm:$0xf]
    %v126 = vld [vmem:[%s2 + $0xd4] sm:$0xf]
    %v127 = vld [vmem:[%s2 + $0xd8] sm:$0xf]
    %v128 = vld [vmem:[%s2 + $0xdc] sm:$0xf]
    %v129 = vld [vmem:[%s2 + $0xe0] sm:$0xf]
    %v130 = vld [vmem:[%s2 + $0xe4] sm:$0xf]
    %v131 = vld [vmem:[%s2 + $0xe8] sm:$0xf]
    %v132 = vld [vmem:[%s2 + $0xec] sm:$0xf]
    %v133 = vld [vmem:[%s2 + $0xf0] sm:$0xf]
    %v134 = vld [vmem:[%s2 + $0xf4] sm:$0xf]
    %v135 = vld [vmem:[%s2 + $0xf8] sm:$0xf]
    %v136 = vld [vmem:[%s2 + $0xfc] sm:$0xf]
    %v137 = vld [vmem:[%s2 + $0x100] sm:$0xf]
    %v138 = vld [vmem:[%s2 + $0x104] sm:$0xf]
    %v139 = vld [vmem:[%s2 + $0x108] sm:$0xf]
    %v140 = vld [vmem:[%s2 + $0x10c] sm:$0xf]
    %v141 = vld [vmem:[%s2 + $0x110] sm:$0xf]
    %v142 = vld [vmem:[%s2 + $0x114] sm:$0xf]
    %v143 = vld [vmem:[%s2 + $0x118] sm:$0xf]
    %v144 = vld [vmem:[%s2 + $0x11c] sm:$0xf]
    %v145 = vld [vmem:[%s2 + $0x120] sm:$0xf]
    %v146 = vld [vmem:[%s2 + $0x124] sm:$0xf]
    %v147 = vld [vmem:[%s2 + $0x128] sm:$0xf]
    %v148 = vld [vmem:[%s2 + $0x12c] sm:$0xf]
    %v149 = vld [vmem:[%s2 + $0x130] sm:$0xf]
    %v150 = vld [vmem:[%s2 + $0x134] sm:$0xf]
    %v151 = vld [vmem:[%s2 + $0x138] sm:$0xf]
    %v152 = vld [vmem:[%s2 + $0x13c] sm:$0xf]
    %v153 = vld [vmem:[%s2 + $0x140] sm:$0xf]
    %v154 = vld [vmem:[%s2 + $0x144] sm:$0xf]
    %v155 = vld [vmem:[%s2 + $0x148] sm:$0xf]
    %v156 = vld [vmem:[%s2 + $0x14c] sm:$0xf]
    %v157 = vld [vmem:[%s2 + $0x150] sm:$0xf]
    %v158 = vld [vmem:[%s2 + $0x154] sm:$0xf]
    %v159 = vld [vmem:[%s2 + $0x158] sm:$0xf]
    %v160 = vld [vmem:[%s2 + $0x15c] sm:$0xf]
    %v161 = vld [vmem:[%s2 + $0x160] sm:$0xf]
    %v162 = vld [vmem:[%s2 + $0x164] sm:$0xf]
    %v163 = vld [vmem:[%s2 + $0x168] sm:$0xf]
    %v164 = vld [vmem:[%s2 + $0x16c] sm:$0xf]
    %v165 = vld [vmem:[%s2 + $0x170] sm:$0xf]
    %v166 = vld [vmem:[%s2 + $0x174] sm:$0xf]
    %v167 = vld [vmem:[%s2 + $0x178] sm:$0xf]
    %v168 = vld [vmem:[%s2 + $0x17c] sm:$0xf]
    %v169 = vld [vmem:[%s2 + $0x180] sm:$0xf]
    %v170 = vld [vmem:[%s2 + $0x184] sm:$0xf]
    %v171 = vld [vmem:[%s2 + $0x188] sm:$0xf]
    %v172 = vld [vmem:[%s2 + $0x18c] sm:$0xf]
    %v173 = vld [vmem:[%s2 + $0x190] sm:$0xf]
    %v174 = vld [vmem:[%s2 + $0x194] sm:$0xf]
    %v175 = vld [vmem:[%s2 + $0x198] sm:$0xf]
    %v176 = vld [vmem:[%s2 + $0x19c] sm:$0xf]
    %v177 = vld [vmem:[%s2 + $0x1a0] sm:$0xf]
    %v178 = vld [vmem:[%s2 + $0x1a4] sm:$0xf]
    %v179 = vld [vmem:[%s2 + $0x1a8] sm:$0xf]
    %v180 = vld [vmem:[%s2 + $0x1ac] sm:$0xf]
    %v181 = vld [vmem:[%s2 + $0x1b0] sm:$0xf]
    %v182 = vld [vmem:[%s2 + $0x1b4] sm:$0xf]
    %v183 = vld [vmem:[%s2 + $0x1b8] sm:$0xf]
    %v184 = vld [vmem:[%s2 + $0x1bc] sm:$0xf]
    %v185 = vld [vmem:[%s2 + $0x1c0] sm:$0xf]
    %v186 = vld [vmem:[%s2 + $0x1c4] sm:$0xf]
    %v187 = vld [vmem:[%s2 + $0x1c8] sm:$0xf]
    %v188 = vld [vmem:[%s2 + $0x1cc] sm:$0xf]
    %v189 = vld [vmem:[%s2 + $0x1d0] sm:$0xf]
    %v190 = vld [vmem:[%s2 + $0x1d4] sm:$0xf]
    %v191 = vld [vmem:[%s2 + $0x1d8] sm:$0xf]
    %v192 = vld [vmem:[%s2 + $0x1dc] sm:$0xf]
    %v193 = vld [vmem:[%s2 + $0x1e0] sm:$0xf]
    %v194 = vld [vmem:[%s2 + $0x1e4] sm:$0xf]
    %v195 = vld [vmem:[%s2 + $0x1e8] sm:$0xf]
    %v196 = vld [vmem:[%s2 + $0x1ec] sm:$0xf]
    %v197 = vld [vmem:[%s2 + $0x1f0] sm:$0xf]
    %v198 = vld [vmem:[%s2 + $0x1f4] sm:$0xf]
    %v199 = vld [vmem:[%s2 + $0x1f8] sm:$0xf]
    %v200 = vld [vmem:[%s2 + $0x1fc] sm:$0xf]
    %v201 = vld [vmem:[%s1] sm:$0xff]
    %v202 = vld [vmem:[%s3] sm:$0x3]
    %204 = vset.pattern.permute.xlu0 0
    %205 = vperm.xlu0 %204, %v201
    %v206 = vpop.permute.xlu0 %205
    %v208 = vperm.slane %v202, 0
    %v209 = vmul.f32 %v206, %v208
    %210 = vset.pattern.permute.xlu0 1
    %211 = vperm.xlu0 %210, %v201
    %v212 = vpop.permute.xlu0 %211
    %v214 = vperm.slane %v202, 1
    %v215 = vmul.f32 %v212, %v214
    %v216 = vadd.f32 %v209, %v215
    %v345 = vunpack.c.l.b16 %v73
    %v346 = vunpack.c.l.b16 %v74
    %v347 = vunpack.c.l.b16 %v75
    %v348 = vunpack.c.l.b16 %v76
    %v349 = vunpack.c.l.b16 %v77
    %v350 = vunpack.c.l.b16 %v78
    %v351 = vunpack.c.l.b16 %v79
    %v352 = vunpack.c.l.b16 %v80
    %v353 = vunpack.c.l.b16 %v81
    %v354 = vunpack.c.l.b16 %v82
    %v355 = vunpack.c.l.b16 %v83
    %v356 = vunpack.c.l.b16 %v84
    %v357 = vunpack.c.l.b16 %v85
    %v358 = vunpack.c.l.b16 %v86
    %v359 = vunpack.c.l.b16 %v87
    %v360 = vunpack.c.l.b16 %v88
    %v361 = vunpack.c.l.b16 %v89
    %v362 = vunpack.c.l.b16 %v90
    %v363 = vunpack.c.l.b16 %v91
    %v364 = vunpack.c.l.b16 %v92
    %v365 = vunpack.c.l.b16 %v93
    %v366 = vunpack.c.l.b16 %v94
    %v367 = vunpack.c.l.b16 %v95
    %v368 = vunpack.c.l.b16 %v96
    %v369 = vunpack.c.l.b16 %v97
    %v370 = vunpack.c.l.b16 %v98
    %v371 = vunpack.c.l.b16 %v99
    %v372 = vunpack.c.l.b16 %v100
    %v373 = vunpack.c.l.b16 %v101
    %v374 = vunpack.c.l.b16 %v102
    %v375 = vunpack.c.l.b16 %v103
    %v376 = vunpack.c.l.b16 %v104
    %v377 = vunpack.c.l.b16 %v105
    %v378 = vunpack.c.l.b16 %v106
    %v379 = vunpack.c.l.b16 %v107
    %v380 = vunpack.c.l.b16 %v108
    %v381 = vunpack.c.l.b16 %v109
    %v382 = vunpack.c.l.b16 %v110
    %v383 = vunpack.c.l.b16 %v111
    %v384 = vunpack.c.l.b16 %v112
    %v385 = vunpack.c.l.b16 %v113
    %v386 = vunpack.c.l.b16 %v114
    %v387 = vunpack.c.l.b16 %v115
    %v388 = vunpack.c.l.b16 %v116
    %v389 = vunpack.c.l.b16 %v117
    %v390 = vunpack.c.l.b16 %v118
    %v391 = vunpack.c.l.b16 %v119
    %v392 = vunpack.c.l.b16 %v120
    %v393 = vunpack.c.l.b16 %v121
    %v394 = vunpack.c.l.b16 %v122
    %v395 = vunpack.c.l.b16 %v123
    %v396 = vunpack.c.l.b16 %v124
    %v397 = vunpack.c.l.b16 %v125
    %v398 = vunpack.c.l.b16 %v126
    %v399 = vunpack.c.l.b16 %v127
    %v400 = vunpack.c.l.b16 %v128
    %v401 = vunpack.c.l.b16 %v129
    %v402 = vunpack.c.l.b16 %v130
    %v403 = vunpack.c.l.b16 %v131
    %v404 = vunpack.c.l.b16 %v132
    %v405 = vunpack.c.l.b16 %v133
    %v406 = vunpack.c.l.b16 %v134
    %v407 = vunpack.c.l.b16 %v135
    %v408 = vunpack.c.l.b16 %v136
    %v409 = vunpack.c.l.b16 %v137
    %v410 = vunpack.c.l.b16 %v138
    %v411 = vunpack.c.l.b16 %v139
    %v412 = vunpack.c.l.b16 %v140
    %v413 = vunpack.c.l.b16 %v141
    %v414 = vunpack.c.l.b16 %v142
    %v415 = vunpack.c.l.b16 %v143
    %v416 = vunpack.c.l.b16 %v144
    %v417 = vunpack.c.l.b16 %v145
    %v418 = vunpack.c.l.b16 %v146
    %v419 = vunpack.c.l.b16 %v147
    %v420 = vunpack.c.l.b16 %v148
    %v421 = vunpack.c.l.b16 %v149
    %v422 = vunpack.c.l.b16 %v150
    %v423 = vunpack.c.l.b16 %v151
    %v424 = vunpack.c.l.b16 %v152
    %v425 = vunpack.c.l.b16 %v153
    %v426 = vunpack.c.l.b16 %v154
    %v427 = vunpack.c.l.b16 %v155
    %v428 = vunpack.c.l.b16 %v156
    %v429 = vunpack.c.l.b16 %v157
    %v430 = vunpack.c.l.b16 %v158
    %v431 = vunpack.c.l.b16 %v159
    %v432 = vunpack.c.l.b16 %v160
    %v433 = vunpack.c.l.b16 %v161
    %v434 = vunpack.c.l.b16 %v162
    %v435 = vunpack.c.l.b16 %v163
    %v436 = vunpack.c.l.b16 %v164
    %v437 = vunpack.c.l.b16 %v165
    %v438 = vunpack.c.l.b16 %v166
    %v439 = vunpack.c.l.b16 %v167
    %v440 = vunpack.c.l.b16 %v168
    %v441 = vunpack.c.l.b16 %v169
    %v442 = vunpack.c.l.b16 %v170
    %v443 = vunpack.c.l.b16 %v171
    %v444 = vunpack.c.l.b16 %v172
    %v445 = vunpack.c.l.b16 %v173
    %v446 = vunpack.c.l.b16 %v174
    %v447 = vunpack.c.l.b16 %v175
    %v448 = vunpack.c.l.b16 %v176
    %v449 = vunpack.c.l.b16 %v177
    %v450 = vunpack.c.l.b16 %v178
    %v451 = vunpack.c.l.b16 %v179
    %v452 = vunpack.c.l.b16 %v180
    %v453 = vunpack.c.l.b16 %v181
    %v454 = vunpack.c.l.b16 %v182
    %v455 = vunpack.c.l.b16 %v183
    %v456 = vunpack.c.l.b16 %v184
    %v457 = vunpack.c.l.b16 %v185
    %v458 = vunpack.c.l.b16 %v186
    %v459 = vunpack.c.l.b16 %v187
    %v460 = vunpack.c.l.b16 %v188
    %v461 = vunpack.c.l.b16 %v189
    %v462 = vunpack.c.l.b16 %v190
    %v463 = vunpack.c.l.b16 %v191
    %v464 = vunpack.c.l.b16 %v192
    %v465 = vunpack.c.l.b16 %v193
    %v466 = vunpack.c.l.b16 %v194
    %v467 = vunpack.c.l.b16 %v195
    %v468 = vunpack.c.l.b16 %v196
    %v469 = vunpack.c.l.b16 %v197
    %v470 = vunpack.c.l.b16 %v198
    %v471 = vunpack.c.l.b16 %v199
    %v472 = vunpack.c.l.b16 %v200
    %v473 = vpack.c.b16 %v346, %v345
    %v474 = vpack.c.b16 %v348, %v347
    %v475 = vpack.c.b16 %v350, %v349
    %v476 = vpack.c.b16 %v352, %v351
    %v477 = vpack.c.b16 %v354, %v353
    %v478 = vpack.c.b16 %v356, %v355
    %v479 = vpack.c.b16 %v358, %v357
    %v480 = vpack.c.b16 %v360, %v359
    %v481 = vpack.c.b16 %v362, %v361
    %v482 = vpack.c.b16 %v364, %v363
    %v483 = vpack.c.b16 %v366, %v365
    %v484 = vpack.c.b16 %v368, %v367
    %v485 = vpack.c.b16 %v370, %v369
    %v486 = vpack.c.b16 %v372, %v371
    %v487 = vpack.c.b16 %v374, %v373
    %v488 = vpack.c.b16 %v376, %v375
    %v489 = vpack.c.b16 %v378, %v377
    %v490 = vpack.c.b16 %v380, %v379
    %v491 = vpack.c.b16 %v382, %v381
    %v492 = vpack.c.b16 %v384, %v383
    %v493 = vpack.c.b16 %v386, %v385
    %v494 = vpack.c.b16 %v388, %v387
    %v495 = vpack.c.b16 %v390, %v389
    %v496 = vpack.c.b16 %v392, %v391
    %v497 = vpack.c.b16 %v394, %v393
    %v498 = vpack.c.b16 %v396, %v395
    %v499 = vpack.c.b16 %v398, %v397
    %v500 = vpack.c.b16 %v400, %v399
    %v501 = vpack.c.b16 %v402, %v401
    %v502 = vpack.c.b16 %v404, %v403
    %v503 = vpack.c.b16 %v406, %v405
    %v504 = vpack.c.b16 %v408, %v407
    %v505 = vpack.c.b16 %v410, %v409
    %v506 = vpack.c.b16 %v412, %v411
    %v507 = vpack.c.b16 %v414, %v413
    %v508 = vpack.c.b16 %v416, %v415
    %v509 = vpack.c.b16 %v418, %v417
    %v510 = vpack.c.b16 %v420, %v419
    %v511 = vpack.c.b16 %v422, %v421
    %v512 = vpack.c.b16 %v424, %v423
    %v513 = vpack.c.b16 %v426, %v425
    %v514 = vpack.c.b16 %v428, %v427
    %v515 = vpack.c.b16 %v430, %v429
    %v516 = vpack.c.b16 %v432, %v431
    %v517 = vpack.c.b16 %v434, %v433
    %v518 = vpack.c.b16 %v436, %v435
    %v519 = vpack.c.b16 %v438, %v437
    %v520 = vpack.c.b16 %v440, %v439
    %v521 = vpack.c.b16 %v442, %v441
    %v522 = vpack.c.b16 %v444, %v443
    %v523 = vpack.c.b16 %v446, %v445
    %v524 = vpack.c.b16 %v448, %v447
    %v525 = vpack.c.b16 %v450, %v449
    %v526 = vpack.c.b16 %v452, %v451
    %v527 = vpack.c.b16 %v454, %v453
    %v528 = vpack.c.b16 %v456, %v455
    %v529 = vpack.c.b16 %v458, %v457
    %v530 = vpack.c.b16 %v460, %v459
    %v531 = vpack.c.b16 %v462, %v461
    %v532 = vpack.c.b16 %v464, %v463
    %v533 = vpack.c.b16 %v466, %v465
    %v534 = vpack.c.b16 %v468, %v467
    %v535 = vpack.c.b16 %v470, %v469
    %v536 = vpack.c.b16 %v472, %v471
    %601 = vmatpush.bf16.msra.mxu0 %v480
    %602 = vmatpush.bf16.msra.mxu0 %v479
    %603 = vmatpush.bf16.msra.mxu0 %v478
    %604 = vmatpush.bf16.msra.mxu0 %v477
    %605 = vmatpush.bf16.msra.mxu0 %v476
    %606 = vmatpush.bf16.msra.mxu0 %v475
    %607 = vmatpush.bf16.msra.mxu0 %v474
    %608 = vmatpush.bf16.msra.mxu0 %v473
    %609 = vmatmul.bf16.gmra.mxu0 %v65
    %v610 = vpop.f32.mrf.mxu0
    %v611 = vadd.f32 %v216, %v610
    %v612 = vpop.f32.mrf.mxu0
    %613 = vdwg.mxu0
    %614 = vmatpush.bf16.msra.mxu0 %v488
    %615 = vmatpush.bf16.msra.mxu0 %v487
    %616 = vmatpush.bf16.msra.mxu0 %v486
    %617 = vmatpush.bf16.msra.mxu0 %v485
    %618 = vmatpush.bf16.msra.mxu0 %v484
    %619 = vmatpush.bf16.msra.mxu0 %v483
    %620 = vmatpush.bf16.msra.mxu0 %v482
    %621 = vmatpush.bf16.msra.mxu0 %v481
    %622 = vmatmul.bf16.gmra.mxu0 %v66
    %v623 = vpop.f32.mrf.mxu0
    %v624 = vadd.f32 %v611, %v623
    %v625 = vpop.f32.mrf.mxu0
    %626 = vdwg.mxu0
    %627 = vmatpush.bf16.msra.mxu0 %v496
    %628 = vmatpush.bf16.msra.mxu0 %v495
    %629 = vmatpush.bf16.msra.mxu0 %v494
    %630 = vmatpush.bf16.msra.mxu0 %v493
    %631 = vmatpush.bf16.msra.mxu0 %v492
    %632 = vmatpush.bf16.msra.mxu0 %v491
    %633 = vmatpush.bf16.msra.mxu0 %v490
    %634 = vmatpush.bf16.msra.mxu0 %v489
    %635 = vmatmul.bf16.gmra.mxu0 %v67
    %v636 = vpop.f32.mrf.mxu0
    %v637 = vadd.f32 %v624, %v636
    %v638 = vpop.f32.mrf.mxu0
    %639 = vdwg.mxu0
    %640 = vmatpush.bf16.msra.mxu0 %v504
    %641 = vmatpush.bf16.msra.mxu0 %v503
    %642 = vmatpush.bf16.msra.mxu0 %v502
    %643 = vmatpush.bf16.msra.mxu0 %v501
    %644 = vmatpush.bf16.msra.mxu0 %v500
    %645 = vmatpush.bf16.msra.mxu0 %v499
    %646 = vmatpush.bf16.msra.mxu0 %v498
    %647 = vmatpush.bf16.msra.mxu0 %v497
    %648 = vmatmul.bf16.gmra.mxu0 %v68
    %v649 = vpop.f32.mrf.mxu0
    %v650 = vadd.f32 %v637, %v649
    %v651 = vpop.f32.mrf.mxu0
    %652 = vdwg.mxu0
    %653 = vmatpush.bf16.msra.mxu0 %v512
    %654 = vmatpush.bf16.msra.mxu0 %v511
    %655 = vmatpush.bf16.msra.mxu0 %v510
    %656 = vmatpush.bf16.msra.mxu0 %v509
    %657 = vmatpush.bf16.msra.mxu0 %v508
    %658 = vmatpush.bf16.msra.mxu0 %v507
    %659 = vmatpush.bf16.msra.mxu0 %v506
    %660 = vmatpush.bf16.msra.mxu0 %v505
    %661 = vmatmul.bf16.gmra.mxu0 %v69
    %v662 = vpop.f32.mrf.mxu0
    %v663 = vadd.f32 %v650, %v662
    %v664 = vpop.f32.mrf.mxu0
    %665 = vdwg.mxu0
    %666 = vmatpush.bf16.msra.mxu0 %v520
    %667 = vmatpush.bf16.msra.mxu0 %v519
    %668 = vmatpush.bf16.msra.mxu0 %v518
    %669 = vmatpush.bf16.msra.mxu0 %v517
    %670 = vmatpush.bf16.msra.mxu0 %v516
    %671 = vmatpush.bf16.msra.mxu0 %v515
    %672 = vmatpush.bf16.msra.mxu0 %v514
    %673 = vmatpush.bf16.msra.mxu0 %v513
    %674 = vmatmul.bf16.gmra.mxu0 %v70
    %v675 = vpop.f32.mrf.mxu0
    %v676 = vadd.f32 %v663, %v675
    %v677 = vpop.f32.mrf.mxu0
    %678 = vdwg.mxu0
    %679 = vmatpush.bf16.msra.mxu0 %v528
    %680 = vmatpush.bf16.msra.mxu0 %v527
    %681 = vmatpush.bf16.msra.mxu0 %v526
    %682 = vmatpush.bf16.msra.mxu0 %v525
    %683 = vmatpush.bf16.msra.mxu0 %v524
    %684 = vmatpush.bf16.msra.mxu0 %v523
    %685 = vmatpush.bf16.msra.mxu0 %v522
    %686 = vmatpush.bf16.msra.mxu0 %v521
    %687 = vmatmul.bf16.gmra.mxu0 %v71
    %v688 = vpop.f32.mrf.mxu0
    %v689 = vadd.f32 %v676, %v688
    %v690 = vpop.f32.mrf.mxu0
    %691 = vdwg.mxu0
    %692 = vmatpush.bf16.msra.mxu0 %v536
    %693 = vmatpush.bf16.msra.mxu0 %v535
    %694 = vmatpush.bf16.msra.mxu0 %v534
    %695 = vmatpush.bf16.msra.mxu0 %v533
    %696 = vmatpush.bf16.msra.mxu0 %v532
    %697 = vmatpush.bf16.msra.mxu0 %v531
    %698 = vmatpush.bf16.msra.mxu0 %v530
    %699 = vmatpush.bf16.msra.mxu0 %v529
    %700 = vmatmul.bf16.gmra.mxu0 %v72
    %v701 = vpop.f32.mrf.mxu0
    %v702 = vadd.f32 %v689, %v701
    %v703 = vpop.f32.mrf.mxu0
    %704 = vdwg.mxu0
    %v705 = vld [vmem:[%s4] sm:$0x1]
    %v707 = vperm.slane %v705, 0
    %v709 = vadd.f32 %v702, %v707
    %v710 = vld [vmem:[%s5] sm:$0xff]
    %v711 = vld [vmem:[%s5 + $0x8] sm:$0xff]
    %v712 = vld [vmem:[%s5 + $0x10] sm:$0xff]
    %v713 = vld [vmem:[%s5 + $0x18] sm:$0xff]
    %v714 = vld [vmem:[%s6] sm:$0x1]
    %v716 = vperm.slane %v714, 0
    %vm718 = vcmask 261120
    %v720 = vsel %vm718, %v709, 0
    %722 = vmatpush.msra.mxu0 0.0
    %723 = vmatpush.msra.mxu0 0.0
    %724 = vmatpush.msra.mxu0 0.0
    %725 = vmatpush.msra.mxu0 0.0
    %726 = vmatpush.msra.mxu0 0.0
    %727 = vmatpush.msra.mxu0 0.0
    %728 = vmatpush.msra.mxu0 0.0
    %729 = vmatpush.msra.mxu0 0.0
    %730 = vmatpush.msra.mxu0 0.0
    %731 = vmatpush.msra.mxu0 0.0
    %732 = vmatpush.msra.mxu0 0.0
    %733 = vmatpush.msra.mxu0 0.0
    %734 = vmatpush.msra.mxu0 %v713
    %735 = vmatpush.msra.mxu0 %v712
    %736 = vmatpush.msra.mxu0 %v711
    %737 = vmatpush.msra.mxu0 %v710
    %738 = vmatmul.f32.gmra.mxu0 %v720
    %v739 = vpop.f32.mrf.mxu0
    %v740 = vadd.f32 %v716, %v739
    %741 = vdwg.mxu0
    %743 = vrot.lane.b32.xlu0 %v740, 96
    %v744 = vpop.permute.xlu0 %743
    %v745 = vsel %vm718, %v740, 0
    %v747 = vsel %vm718, %v744, 0
    %749 = vmatpush.xpose.msra.mxu0 0.0
    %750 = vmatpush.xpose.msra.mxu0 0.0
    %751 = vmatpush.xpose.msra.mxu0 0.0
    %752 = vmatpush.xpose.msra.mxu0 0.0
    %753 = vmatpush.xpose.msra.mxu0 0.0
    %754 = vmatpush.xpose.msra.mxu0 0.0
    %755 = vmatpush.xpose.msra.mxu0 0.0
    %756 = vmatpush.xpose.msra.mxu0 0.0
    %757 = vmatpush.xpose.msra.mxu0 0.0
    %758 = vmatpush.xpose.msra.mxu0 0.0
    %759 = vmatpush.xpose.msra.mxu0 0.0
    %760 = vmatpush.xpose.msra.mxu0 0.0
    %761 = vmatpush.xpose.msra.mxu0 0.0
    %762 = vmatpush.xpose.msra.mxu0 0.0
    %763 = vmatpush.xpose.msra.mxu0 0.0
    %764 = vmatpush.xpose.msra.mxu0 %v747
    %765 = vmatmul.f32.gmra.mxu0 %v745
    %v766 = vpop.f32.mrf.mxu0
    %v767 = vadd.f32 0.0, %v766
    %768 = vdwg.mxu0
    %v769 = vmul.f32 %v767, 0.17677669
    %vm770 = vcmask 64512
    %v771 = vsel %vm770, %v769, -inf
    %772 = vmax.xlane.f32.xlu0 %v771
    %v773 = vpop.xlane.xlu0 %772
    %v774 = vsub.f32 %v769, %v773
    %v775 = vmul.f32 %v774, 1.442695
    %v776 = vpow.pop %v775
    %v777 = vsel %vm770, %v776, 0.0
    %778 = vadd.xlane.f32.xlu0 %v777
    %v779 = vpop.xlane.xlu0 %778
    %v780 = vrcp.pop %v779
    %v781 = vmul.f32 %v776, %v780
    %782 = vst.msk [vmem:[#allocation6] sm:$0xff] %vm770, %v781
    %783 = vrot.lane.b32.xlu0 %v740, 64
    %v784 = vpop.permute.xlu0 %783
    %v787 = vsel %vm770, %v781, 0
    %789 = vmatpush.msra.mxu0 0.0
    %790 = vmatpush.msra.mxu0 0.0
    %791 = vmatpush.msra.mxu0 0.0
    %792 = vmatpush.msra.mxu0 0.0
    %793 = vmatpush.msra.mxu0 0.0
    %794 = vmatpush.msra.mxu0 0.0
    %795 = vmatpush.msra.mxu0 0.0
    %796 = vmatpush.msra.mxu0 0.0
    %797 = vmatpush.msra.mxu0 0.0
    %798 = vmatpush.msra.mxu0 0.0
    %799 = vmatpush.msra.mxu0 0.0
    %800 = vmatpush.msra.mxu0 0.0
    %801 = vmatpush.msra.mxu0 0.0
    %802 = vmatpush.msra.mxu0 0.0
    %803 = vmatpush.msra.mxu0 0.0
    %804 = vmatpush.msra.mxu0 %v784
    %805 = vmatmul.f32.gmra.mxu0 %v787
    %v806 = vpop.f32.mrf.mxu0
    %v807 = vadd.f32 0.0, %v806
    %808 = vdwg.mxu0
    %v809 = vld [vmem:[%s7] sm:$0xff]
    %v810 = vld [vmem:[%s7 + $0x8] sm:$0xff]
    %v811 = vld [vmem:[%s7 + $0x10] sm:$0xff]
    %v812 = vld [vmem:[%s7 + $0x18] sm:$0xff]
    %v813 = vld [vmem:[%s8] sm:$0x1]
    %v815 = vperm.slane %v813, 0
    %v818 = vsel %vm718, %v807, 0
    %820 = vmatpush.msra.mxu0 0.0
    %821 = vmatpush.msra.mxu0 0.0
    %822 = vmatpush.msra.mxu0 0.0
    %823 = vmatpush.msra.mxu0 0.0
    %824 = vmatpush.msra.mxu0 0.0
    %825 = vmatpush.msra.mxu0 0.0
    %826 = vmatpush.msra.mxu0 0.0
    %827 = vmatpush.msra.mxu0 0.0
    %828 = vmatpush.msra.mxu0 0.0
    %829 = vmatpush.msra.mxu0 0.0
    %830 = vmatpush.msra.mxu0 0.0
    %831 = vmatpush.msra.mxu0 0.0
    %832 = vmatpush.msra.mxu0 %v812
    %833 = vmatpush.msra.mxu0 %v811
    %834 = vmatpush.msra.mxu0 %v810
    %835 = vmatpush.msra.mxu0 %v809
    %836 = vmatmul.f32.gmra.mxu0 %v818
    %v837 = vpop.f32.mrf.mxu0
    %v838 = vadd.f32 %v815, %v837
    %839 = vdwg.mxu0
    %v840 = vadd.f32 %v838, %v709
    %v841 = vld [vmem:[%s9] sm:$0xff]
    %v842 = vld [vmem:[%s9 + $0x8] sm:$0xff]
    %v843 = vld [vmem:[%s9 + $0x10] sm:$0xff]
    %v844 = vld [vmem:[%s9 + $0x18] sm:$0xff]
    %v845 = vld [vmem:[%s10] sm:$0x1]
    %v847 = vperm.slane %v845, 0
    %v850 = vsel %vm718, %v840, 0
    %852 = vmatpush.msra.mxu0 0.0
    %853 = vmatpush.msra.mxu0 0.0
    %854 = vmatpush.msra.mxu0 0.0
    %855 = vmatpush.msra.mxu0 0.0
    %856 = vmatpush.msra.mxu0 0.0
    %857 = vmatpush.msra.mxu0 0.0
    %858 = vmatpush.msra.mxu0 0.0
    %859 = vmatpush.msra.mxu0 0.0
    %860 = vmatpush.msra.mxu0 0.0
    %861 = vmatpush.msra.mxu0 0.0
    %862 = vmatpush.msra.mxu0 0.0
    %863 = vmatpush.msra.mxu0 0.0
    %864 = vmatpush.msra.mxu0 %v844
    %865 = vmatpush.msra.mxu0 %v843
    %866 = vmatpush.msra.mxu0 %v842
    %867 = vmatpush.msra.mxu0 %v841
    %868 = vmatmul.f32.gmra.mxu0 %v850
    %v869 = vpop.f32.mrf.mxu0
    %v870 = vadd.f32 %v847, %v869
    %871 = vdwg.mxu0
    %v872 = vmax.f32 %v870, 0.0
    %v873 = vld [vmem:[%s11] sm:$0xff]
    %v874 = vld [vmem:[%s11 + $0x8] sm:$0xff]
    %v875 = vld [vmem:[%s11 + $0x10] sm:$0xff]
    %v876 = vld [vmem:[%s11 + $0x18] sm:$0xff]
    %v877 = vld [vmem:[%s11 + $0x20] sm:$0xff]
    %v878 = vld [vmem:[%s11 + $0x28] sm:$0xff]
    %v879 = vld [vmem:[%s11 + $0x30] sm:$0xff]
    %v880 = vld [vmem:[%s11 + $0x38] sm:$0xff]
    %v881 = vld [vmem:[%s12] sm:$0x1]
    %v883 = vperm.slane %v881, 0
    %vm885 = vcmask 523264
    %v887 = vsel %vm885, %v872, 0
    %889 = vmatpush.msra.mxu0 0.0
    %890 = vmatpush.msra.mxu0 0.0
    %891 = vmatpush.msra.mxu0 0.0
    %892 = vmatpush.msra.mxu0 0.0
    %893 = vmatpush.msra.mxu0 0.0
    %894 = vmatpush.msra.mxu0 0.0
    %895 = vmatpush.msra.mxu0 0.0
    %896 = vmatpush.msra.mxu0 0.0
    %897 = vmatpush.msra.mxu0 %v880
    %898 = vmatpush.msra.mxu0 %v879
    %899 = vmatpush.msra.mxu0 %v878
    %900 = vmatpush.msra.mxu0 %v877
    %901 = vmatpush.msra.mxu0 %v876
    %902 = vmatpush.msra.mxu0 %v875
    %903 = vmatpush.msra.mxu0 %v874
    %904 = vmatpush.msra.mxu0 %v873
    %905 = vmatmul.f32.gmra.mxu0 %v887
    %v906 = vpop.f32.mrf.mxu0
    %v907 = vadd.f32 %v883, %v906
    %908 = vdwg.mxu0
    %v909 = vadd.f32 %v907, %v840
    %910 = vst.msk [vmem:[#allocation2] sm:$0xff] %vm718, %v909
    %v911 = vsel %vm718, %v909, 0.0
    %v912 = vrot.slane %v911, 4
    %v913 = vadd.f32 %v911, %v912
    %v914 = vrot.slane %v913, 2
    %v915 = vadd.f32 %v913, %v914
    %v916 = vrot.slane %v915, 1
    %v917 = vadd.f32 %v915, %v916
    %v918 = vrcp.pop 8.0
    %v919 = vmul.f32 8.0, %v918
    %v920 = vsub.f32 1.0, %v919
    %v921 = vmul.f32 %v918, %v920
    %v922 = vadd.f32 %v918, %v921
    %vm923 = vweird.f32 %v918
    %v924 = vsel %vm923, %v918, %v922
    %v925 = vmul.f32 %v917, %v924
    %vm926 = vcmask 253952
    %927 = vst.msk [vmem:[#allocation4] sm:$0x1] %vm926, %v925
    %v928 = vld [vmem:[%s13] sm:$0xff]
    %v929 = vld [vmem:[%s13 + $0x8] sm:$0xff]
    %v930 = vld [vmem:[%s13 + $0x10] sm:$0xff]
    %v931 = vld [vmem:[%s13 + $0x18] sm:$0xff]
    %v932 = vld [vmem:[%s14] sm:$0x1]
    %v934 = vsel %vm718, %v925, 0
    %936 = vmatpush.msra.mxu0 0.0
    %937 = vmatpush.msra.mxu0 0.0
    %938 = vmatpush.msra.mxu0 0.0
    %939 = vmatpush.msra.mxu0 0.0
    %940 = vmatpush.msra.mxu0 0.0
    %941 = vmatpush.msra.mxu0 0.0
    %942 = vmatpush.msra.mxu0 0.0
    %943 = vmatpush.msra.mxu0 0.0
    %944 = vmatpush.msra.mxu0 0.0
    %945 = vmatpush.msra.mxu0 0.0
    %946 = vmatpush.msra.mxu0 0.0
    %947 = vmatpush.msra.mxu0 0.0
    %948 = vmatpush.msra.mxu0 %v931
    %949 = vmatpush.msra.mxu0 %v930
    %950 = vmatpush.msra.mxu0 %v929
    %951 = vmatpush.msra.mxu0 %v928
    %952 = vmatmul.f32.gmra.mxu0 %v934
    %v953 = vpop.f32.mrf.mxu0
    %v954 = vadd.f32 %v932, %v953
    %955 = vdwg.mxu0
    %vm956 = vcmask 73728
    %957 = vst.msk [vmem:[#allocation7] sm:$0x1] %vm956, %v954
    // Predicated region
    $region62: #{exact_seq_classifier_forward.1} parent=1 // pred_check
      _
    $region63: #{exact_seq_classifier_forward.1} parent=1 // pred_check_branch
      %959 = sbr.rel (0) target = $region65
    $region64: #{exact_seq_classifier_forward.1} parent=1 // pred_region
      %961 = vsyncadd [#allocation3], 0
      %s963 = sshll.u32 [#allocation2], 4
      %s964 = int_to_ptr.vmem [resolvable:$true] %s963
      %s965 = sshll.u32 %s15, 4
      %s966 = int_to_ptr.hbm [resolvable:$true] %s965
      %968 = dma.vmem_to_hbm [thread:$0]  %s964, 128, %s966, [#allocation3]
    $region65: #{exact_seq_classifier_forward.1} parent=1 // pred_fallthru
      _
    // Predicated region
    $region66: #{exact_seq_classifier_forward.1} parent=1 // pred_check
      _
    $region67: #{exact_seq_classifier_forward.1} parent=1 // pred_check_branch
      %970 = sbr.rel (0) target = $region69
    $region68: #{exact_seq_classifier_forward.1} parent=1 // pred_region
      %972 = vsyncadd [#allocation5], 0
      %s974 = sshll.u32 [#allocation4], 4
      %s975 = int_to_ptr.vmem [resolvable:$true] %s974
      %s976 = sshll.u32 %s16, 4
      %s977 = int_to_ptr.hbm [resolvable:$true] %s976
      %979 = dma.vmem_to_hbm [thread:$0]  %s975, 16, %s977, [#allocation5]
    $region69: #{exact_seq_classifier_forward.1} parent=1 // pred_fallthru
      _
    // Predicated region
    $region70: #{exact_seq_classifier_forward.1} parent=1 // pred_check
      _
    $region71: #{exact_seq_classifier_forward.1} parent=1 // pred_check_branch
      %981 = sbr.rel (0) target = $region73
    $region72: #{exact_seq_classifier_forward.1} parent=1 // pred_region
      %983 = vsyncadd [#allocation5], 0
      %s985 = sshll.u32 [#allocation6], 4
      %s986 = int_to_ptr.vmem [resolvable:$true] %s985
      %s987 = sshll.u32 %s17, 4
      %s988 = int_to_ptr.hbm [resolvable:$true] %s987
      %990 = dma.vmem_to_hbm [thread:$0]  %s986, 128, %s988, [#allocation5]
    $region73: #{exact_seq_classifier_forward.1} parent=1 // pred_fallthru
      _
    // Predicated region
    $region74: #{exact_seq_classifier_forward.1} parent=1 // pred_check
      _
    $region75: #{exact_seq_classifier_forward.1} parent=1 // pred_check_branch
      %992 = sbr.rel (0) target = $region77
    $region76: #{exact_seq_classifier_forward.1} parent=1 // pred_region
      %994 = vsyncadd [#allocation8], 0
      %s996 = sshll.u32 [#allocation7], 4
      %s997 = int_to_ptr.vmem [resolvable:$true] %s996
      %s998 = sshll.u32 %s18, 4
      %s999 = int_to_ptr.hbm [resolvable:$true] %s998
      %1001 = dma.vmem_to_hbm [thread:$0]  %s997, 16, %s999, [#allocation8]
    $region77: #{exact_seq_classifier_forward.1} parent=1 // pred_fallthru
      _
    // Predicated region
    $region78: #{exact_seq_classifier_forward.1} parent=1 // pred_check
      _
    $region79: #{exact_seq_classifier_forward.1} parent=1 // pred_check_branch
      %1003 = sbr.rel (0) target = $region81
    $region80: #{exact_seq_classifier_forward.1} parent=1 // pred_region
      %1005 = dma.done [#allocation3], 128
    $region81: #{exact_seq_classifier_forward.1} parent=1 // pred_fallthru
      _
    // Predicated region
    $region82: #{exact_seq_classifier_forward.1} parent=1 // pred_check
      _
    $region83: #{exact_seq_classifier_forward.1} parent=1 // pred_check_branch
      %1007 = sbr.rel (0) target = $region85
    $region84: #{exact_seq_classifier_forward.1} parent=1 // pred_region
      %1009 = dma.done [#allocation5], 16
    $region85: #{exact_seq_classifier_forward.1} parent=1 // pred_fallthru
      _
    // Predicated region
    $region86: #{exact_seq_classifier_forward.1} parent=1 // pred_check
      _
    $region87: #{exact_seq_classifier_forward.1} parent=1 // pred_check_branch
      %1011 = sbr.rel (0) target = $region89
    $region88: #{exact_seq_classifier_forward.1} parent=1 // pred_region
      %1013 = dma.done [#allocation5], 128
    $region89: #{exact_seq_classifier_forward.1} parent=1 // pred_fallthru
      _
    // Predicated region
    $region90: #{exact_seq_classifier_forward.1} parent=1 // pred_check
      _
    $region91: #{exact_seq_classifier_forward.1} parent=1 // pred_check_branch
      %1015 = sbr.rel (0) target = $region93
    $region92: #{exact_seq_classifier_forward.1} parent=1 // pred_region
      %1017 = dma.done [#allocation8], 16
    $region93: #{exact_seq_classifier_forward.1} parent=1 // pred_fallthru
      _
    %1018 = vsyncpa [#allocation3], 1
    %1019 = vsyncpa [#allocation5], 1
    %1020 = vsyncpa [#allocation8], 1

</llo_original>
